<compile_context>
chip_gen: v6e
topology: v6e:2x2x1
jax: 0.10.0
libtpu: 0.0.40
codegen_flags: <defaults>
</compile_context>

<pallas_src>
import functools

import jax
import jax.numpy as jnp
from jax import lax
from jax.experimental import pallas as pl
from jax.experimental.pallas import tpu as pltpu


def _round_up(x, m):
    return ((x + m - 1) // m) * m


def _leastsq_partials_kernel(c_ref, x_ref, o_ref, xsq_acc, xsum_acc, *,
                             chunk_rows, chunks_per_tile):
    # c_ref:    (1, D)    f32 center vector (mean of Z), resident every step
    # x_ref:    (tn, D)   tile of (possibly zero-padded) data descriptors
    # o_ref:    (1, 2, D) per-split partials: row 0 = sum (x-c)^2, row 1 = sum (x-c)
    # xsq_acc:  (1, D)    f32 lane-dense accumulator of sum_j (X_j-c)*(X_j-c)
    # xsum_acc: (1, D)    f32 lane-dense accumulator of sum_j (X_j-c)
    i = pl.program_id(1)

    @pl.when(i == 0)
    def _():
        xsq_acc[...] = jnp.zeros_like(xsq_acc)
        xsum_acc[...] = jnp.zeros_like(xsum_acc)

    c = c_ref[...].astype(jnp.float32)                      # (1, D), hoisted out of loop

    def body(k, carry):
        start = pl.multiple_of(k * chunk_rows, chunk_rows)
        x = x_ref[pl.ds(start, chunk_rows), :].astype(jnp.float32) - c   # (chunk, D)
        # Sublane-only (row) reductions; lanes stay dense. The cross-lane reduce
        # happens once, in plain JAX, on the tiny (num_splits, 2, D) output.
        xsq_acc[...] += jnp.sum(x * x, axis=0, keepdims=True)
        xsum_acc[...] += jnp.sum(x, axis=0, keepdims=True)
        return carry

    lax.fori_loop(0, chunks_per_tile, body, 0, unroll=True)

    @pl.when(i == pl.num_programs(1) - 1)
    def _():
        o_ref[...] = jnp.concatenate([xsq_acc[...], xsum_acc[...]], axis=0)[None]


def leastsq_loss(Z, X, *, tile_bytes=8 * 1024 * 1024, max_rows_per_tile=16384,
                 chunk_rows=512):
    """loss = ((Z[:, None] - X[None, :]) ** 2).sum()   via a Pallas TPU kernel."""
    m, D = Z.shape
    n, Dx = X.shape
    assert D == Dx
    if n == 0 or m == 0:
        return jnp.float32(0.0)

    # ---- Z statistics hoisted out of the kernel (one tiny pass, plain JAX) ----
    Zf = Z.astype(jnp.float32)
    c = jnp.mean(Zf, axis=0, keepdims=True)            # (1, D) center, f32
    Zc = Zf - c
    z_sq = jnp.sum(Zc * Zc)                            # scalar
    zc_colsum = jnp.sum(Zc, axis=0)                    # (D,) (~0 by construction)

    # ---- layout: pad D to a lane multiple; size a large lane-dense X tile ----
    D_pad = _round_up(D, 128)
    bytes_per_row = D_pad * X.dtype.itemsize
    rows_budget = max(8, min(max_rows_per_tile,
                             (tile_bytes // bytes_per_row) // 8 * 8))

    n_r = _round_up(n, 8)
    tn = min(n_r, rows_budget)
    if tn > chunk_rows:
        tn_up = _round_up(tn, chunk_rows)
        tn = tn_up if tn_up <= rows_budget else (tn // chunk_rows) * chunk_rows
        ch = chunk_rows
    else:
        ch = tn
    chunks_per_tile = tn // ch

    total_tiles = (n_r + tn - 1) // tn
    # Two-way split across the leading "parallel" axis: both TensorCores on v7x,
    # a harmless serial outer loop on v5e/v6e (1 TC).
    num_splits = 2 if total_tiles >= 2 else 1
    tiles_per_split = (total_tiles + num_splits - 1) // num_splits
    n_pad = num_splits * tiles_per_split * tn
    pad_rows = n_pad - n

    X_p = X
    if n_pad != n or D_pad != D:
        X_p = jnp.pad(X, ((0, n_pad - n), (0, D_pad - D)))
    c_pad = jnp.pad(c, ((0, 0), (0, D_pad - D))) if D_pad != D else c

    kernel = functools.partial(_leastsq_partials_kernel,
                               chunk_rows=ch, chunks_per_tile=chunks_per_tile)

    partials = pl.pallas_call(
        kernel,
        out_shape=jax.ShapeDtypeStruct((num_splits, 2, D_pad), jnp.float32),
        grid_spec=pltpu.PrefetchScalarGridSpec(
            num_scalar_prefetch=0,
            grid=(num_splits, tiles_per_split),
            in_specs=[
                pl.BlockSpec((1, D_pad), lambda s, i: (0, 0)),       # center c, resident
                pl.BlockSpec((tn, D_pad),
                             lambda s, i: (s * tiles_per_split + i, 0)),  # X tile stream
            ],
            out_specs=pl.BlockSpec((1, 2, D_pad), lambda s, i: (s, 0, 0)),
            scratch_shapes=[
                pltpu.VMEM((1, D_pad), jnp.float32),   # sum (x-c)^2 per lane
                pltpu.VMEM((1, D_pad), jnp.float32),   # sum (x-c)   per lane
            ],
        ),
        compiler_params=pltpu.CompilerParams(
            dimension_semantics=("parallel", "arbitrary"),
            vmem_limit_bytes=32 * 1024 * 1024,
        ),
    )(c_pad, X_p)

    # ---- tiny final combine in plain JAX ----
    c_vec = c_pad[0]
    # each zero pad row contributed (0 - c): remove those contributions exactly.
    xsq_lane = jnp.sum(partials[:, 0, :], axis=0) - pad_rows * (c_vec * c_vec)
    xsum_lane = jnp.sum(partials[:, 1, :], axis=0) + pad_rows * c_vec
    x_sq = jnp.sum(xsq_lane)
    cross = jnp.sum(zc_colsum * xsum_lane[:D])
    loss = jnp.float32(n) * z_sq + jnp.float32(m) * x_sq - 2.0 * cross
    return loss


def synthetic_soap_descriptors(key, n_rows, natoms, D):
    """Deterministic stand-in for NumpySoap: cart (rows, natoms, 3) -> (rows, D)."""
    k1, k2 = jax.random.split(key)
    cart = jax.random.normal(k1, (n_rows, natoms, 3), dtype=jnp.float32)
    proj = jax.random.normal(k2, (natoms * 3, D), dtype=jnp.float32)
    feats = jnp.tanh(cart.reshape(n_rows, natoms * 3) @ proj)
    return cart, feats


if __name__ == "__main__":
    n, m, D = 16, 1, 128          # n data points, num_inducing=1, descriptor dim
    natoms = 4

    key = jax.random.PRNGKey(0)
    kx, kz, kx2 = jax.random.split(key, 3)

    # X = NumpySoap(cart, sumj=True) stand-in
    _, X = synthetic_soap_descriptors(kx, n, natoms, D)
    # _Z = cart[randint(n, (1,))]; Z = TorchSoap(_Z) stand-in
    _, Z = synthetic_soap_descriptors(kz, m, natoms, D)

    ref = jnp.sum((Z[:, None, :] - X[None, :, :]) ** 2)

    # default path: single large tile, single split
    loss = jax.block_until_ready(leastsq_loss(Z, X))
    assert jnp.allclose(loss, ref, rtol=1e-4, atol=1e-3), (loss, ref)

    # multi-tile + 2-way parallel split path (forced tiny tiles)
    loss2 = jax.block_until_ready(leastsq_loss(Z, X, max_rows_per_tile=8))
    assert jnp.allclose(loss2, ref, rtol=1e-4, atol=1e-3), (loss2, ref)

    # ragged n with zero-padded rows (exercises the pad-row correction)
    _, X3 = synthetic_soap_descriptors(kx2, 20, natoms, D)
    ref3 = jnp.sum((Z[:, None, :] - X3[None, :, :]) ** 2)
    loss3 = jax.block_until_ready(leastsq_loss(Z, X3, max_rows_per_tile=8))
    assert jnp.allclose(loss3, ref3, rtol=1e-4, atol=1e-3), (loss3, ref3)

    print("KERNEL_OK")
</pallas_src>

<mosaic_0001>
module attributes {stable_mosaic.version = 11 : i64} {
  func.func @_leastsq_partials_kernel(%arg0: i32, %arg1: i32, %arg2: memref<1x128xf32, #tpu.memory_space<vmem>>, %arg3: memref<16x128xf32, #tpu.memory_space<vmem>>, %arg4: memref<1x2x128xf32, #tpu.memory_space<vmem>>, %arg5: memref<1x128xf32, #tpu.memory_space<vmem>>, %arg6: memref<1x128xf32, #tpu.memory_space<vmem>>) attributes {dimension_semantics = [#tpu.dimension_semantics<parallel>, #tpu.dimension_semantics<arbitrary>], iteration_bounds = array<i64: 1, 1>, scalar_prefetch = 0 : i64, scratch_operands = 2 : i64, tpu.core_type = #tpu.core_type<tc>, window_params = [{pipeline_mode = #tpu.pipeline_mode<synchronous>, transform_indices = @transform_0, window_bounds = array<i64: 1, 128>}, {transform_indices = @transform_1, window_bounds = array<i64: 16, 128>}, {transform_indices = @transform_2, window_bounds = array<i64: 1, 2, 128>}]} {
    %c0_i32 = arith.constant 0 : i32
    %0 = arith.cmpi eq, %arg1, %c0_i32 : i32
    %1 = arith.extui %0 : i1 to i32
    %c0_i32_0 = arith.constant 0 : i32
    %2 = arith.cmpi ne, %1, %c0_i32_0 : i32
    scf.if %2 {
      %cst_15 = arith.constant 0.000000e+00 : f32
      %24 = vector.broadcast %cst_15 : f32 to vector<1x128xf32>
      %c0_16 = arith.constant 0 : index
      %c0_17 = arith.constant 0 : index
      %25 = vector.load %arg5[%c0_16, %c0_17] : memref<1x128xf32, #tpu.memory_space<vmem>>, vector<1x128xf32>
      tpu.vector_store %arg5[%c0_16, %c0_17], %24 {strides = array<i32>} : memref<1x128xf32, #tpu.memory_space<vmem>>, vector<1x128xf32>,
      %cst_18 = arith.constant 0.000000e+00 : f32
      %26 = vector.broadcast %cst_18 : f32 to vector<1x128xf32>
      %c0_19 = arith.constant 0 : index
      %c0_20 = arith.constant 0 : index
      %27 = vector.load %arg6[%c0_19, %c0_20] : memref<1x128xf32, #tpu.memory_space<vmem>>, vector<1x128xf32>
      tpu.vector_store %arg6[%c0_19, %c0_20], %26 {strides = array<i32>} : memref<1x128xf32, #tpu.memory_space<vmem>>, vector<1x128xf32>,
    } else {
    }
    %c0 = arith.constant 0 : index
    %c0_1 = arith.constant 0 : index
    %3 = vector.load %arg2[%c0, %c0_1] : memref<1x128xf32, #tpu.memory_space<vmem>>, vector<1x128xf32>
    %c0_i32_2 = arith.constant 0 : i32
    %c16_i32 = arith.constant 16 : i32
    %4 = arith.muli %c0_i32_2, %c16_i32 : i32
    %5 = tpu.assume_multiple %4, 16 : i32
    %6 = arith.index_cast %5 : i32 to index
    %c0_3 = arith.constant 0 : index
    %7 = vector.load %arg3[%6, %c0_3] : memref<16x128xf32, #tpu.memory_space<vmem>>, vector<16x128xf32>
    %8 = vector.broadcast %3 : vector<1x128xf32> to vector<16x128xf32>
    %9 = arith.subf %7, %8 : vector<16x128xf32>
    %c0_4 = arith.constant 0 : index
    %c0_5 = arith.constant 0 : index
    %10 = vector.load %arg5[%c0_4, %c0_5] : memref<1x128xf32, #tpu.memory_space<vmem>>, vector<1x128xf32>
    %11 = arith.mulf %9, %9 : vector<16x128xf32>
    %cst = arith.constant dense<0.000000e+00> : vector<128xf32>
    %12 = vector.multi_reduction <add>, %11, %cst [0] : vector<16x128xf32> to vector<128xf32>
    %13 = vector.shape_cast %12 : vector<128xf32> to vector<1x128xf32>
    %14 = arith.addf %10, %13 : vector<1x128xf32>
    %c0_6 = arith.constant 0 : index
    %c0_7 = arith.constant 0 : index
    %15 = vector.load %arg5[%c0_6, %c0_7] : memref<1x128xf32, #tpu.memory_space<vmem>>, vector<1x128xf32>
    tpu.vector_store %arg5[%c0_6, %c0_7], %14 {strides = array<i32>} : memref<1x128xf32, #tpu.memory_space<vmem>>, vector<1x128xf32>,
    %c0_8 = arith.constant 0 : index
    %c0_9 = arith.constant 0 : index
    %16 = vector.load %arg6[%c0_8, %c0_9] : memref<1x128xf32, #tpu.memory_space<vmem>>, vector<1x128xf32>
    %cst_10 = arith.constant dense<0.000000e+00> : vector<128xf32>
    %17 = vector.multi_reduction <add>, %9, %cst_10 [0] : vector<16x128xf32> to vector<128xf32>
    %18 = vector.shape_cast %17 : vector<128xf32> to vector<1x128xf32>
    %19 = arith.addf %16, %18 : vector<1x128xf32>
    %c0_11 = arith.constant 0 : index
    %c0_12 = arith.constant 0 : index
    %20 = vector.load %arg6[%c0_11, %c0_12] : memref<1x128xf32, #tpu.memory_space<vmem>>, vector<1x128xf32>
    tpu.vector_store %arg6[%c0_11, %c0_12], %19 {strides = array<i32>} : memref<1x128xf32, #tpu.memory_space<vmem>>, vector<1x128xf32>,
    %c1_i32 = arith.constant 1 : i32
    %c0_i32_13 = arith.constant 0 : i32
    %21 = arith.cmpi eq, %arg1, %c0_i32_13 : i32
    %22 = arith.extui %21 : i1 to i32
    %c0_i32_14 = arith.constant 0 : i32
    %23 = arith.cmpi ne, %22, %c0_i32_14 : i32
    scf.if %23 {
      %c0_15 = arith.constant 0 : index
      %c0_16 = arith.constant 0 : index
      %24 = vector.load %arg5[%c0_15, %c0_16] : memref<1x128xf32, #tpu.memory_space<vmem>>, vector<1x128xf32>
      %c0_17 = arith.constant 0 : index
      %c0_18 = arith.constant 0 : index
      %25 = vector.load %arg6[%c0_17, %c0_18] : memref<1x128xf32, #tpu.memory_space<vmem>>, vector<1x128xf32>
      %26 = tpu.concatenate %24, %25 in 0 : vector<1x128xf32>, vector<1x128xf32> -> vector<2x128xf32>
      %27 = vector.shape_cast %26 : vector<2x128xf32> to vector<1x2x128xf32>
      %c0_19 = arith.constant 0 : index
      %c0_20 = arith.constant 0 : index
      %c0_21 = arith.constant 0 : index
      %28 = vector.load %arg4[%c0_19, %c0_20, %c0_21] : memref<1x2x128xf32, #tpu.memory_space<vmem>>, vector<1x2x128xf32>
      tpu.vector_store %arg4[%c0_19, %c0_20, %c0_21], %27 {strides = array<i32>} : memref<1x2x128xf32, #tpu.memory_space<vmem>>, vector<1x2x128xf32>,
    } else {
    }
    return
  }
  func.func @transform_0(%arg0: i32, %arg1: i32) -> (i32, i32) {
    %c0_i32 = arith.constant 0 : i32
    %c0_i32_0 = arith.constant 0 : i32
    %c0_i32_1 = arith.constant 0 : i32
    return %c0_i32, %c0_i32_0 : i32, i32
  }
  func.func @transform_1(%arg0: i32, %arg1: i32) -> (i32, i32) {
    %c1_i32 = arith.constant 1 : i32
    %0 = arith.muli %arg0, %c1_i32 : i32
    %1 = arith.addi %0, %arg1 : i32
    %c0_i32 = arith.constant 0 : i32
    %c0_i32_0 = arith.constant 0 : i32
    return %1, %c0_i32 : i32, i32
  }
  func.func @transform_2(%arg0: i32, %arg1: i32) -> (i32, i32, i32) {
    %c0_i32 = arith.constant 0 : i32
    %c0_i32_0 = arith.constant 0 : i32
    %c0_i32_1 = arith.constant 0 : i32
    return %arg0, %c0_i32, %c0_i32_0 : i32, i32, i32
  }
}

</mosaic_0001>

<llo_original>
// kernel: tpu_custom_call.1
$region0: #{tpu_custom_call.1}
  #allocation0 [shape = 'u32[]', space=smem, size = 0x4, offset = 0x4, fixed_abs, tag = 'smem constant byte address 0x4 - core index']
  #allocation1 [shape = 'u32[144,128]{1,0:T(1,128)}', space=vmem, size = 0x12000, scoped, tag = 'internal scratch']
  #allocation2 [shape = 'f32[1,128]{1,0:T(1,128)}', space=vmem, size = 0x200, scoped, tag = 'scratch operand']
  #allocation3 [shape = 'f32[1,128]{1,0:T(1,128)}', space=vmem, size = 0x200, scoped, tag = 'scratch operand']
  %s0 = inlined_call_operand.hbm [shape: f32[1,128], index: 0, kind: input, shape index: {}]
  %s1 = inlined_call_operand.hbm [shape: f32[16,128], index: 1, kind: input, shape index: {}]
  %s2 = inlined_call_operand.hbm [shape: f32[1,2,128], index: 2, kind: output, shape index: {}]
  %s3 = sld [smem:[#allocation0]]
  $region34: #{tpu_custom_call.1} parent=0
    _
  %s5 = ssub.s32 1, %s3
  %s6 = scalar_select 0, %s5, %s3
  $region1: #{tpu_custom_call.1} parent=0
    #allocation4 [shape = 'u8[512]{0}', space=vmem, size = 0x400, scoped, tag = 'input window, operand 0, single buffered']
    #allocation5 [shape = 's32[1]{0}', space=sflag, size = 0x4, scoped, tag = 'scoped memory for tpu_custom_call.1']
    #allocation6 [shape = 's32[1]{0}', space=sflag, size = 0x4, scoped, tag = 'scoped memory for tpu_custom_call.1']
    #allocation7 [shape = 'u8[8192]{0}', space=vmem, size = 0x2000, scoped, tag = 'input window, operand 1, single buffered']
    #allocation8 [shape = 's32[1]{0}', space=sflag, size = 0x4, scoped, tag = 'scoped memory for tpu_custom_call.1']
    #allocation9 [shape = 'u8[1024]{0}', space=vmem, size = 0x400, scoped, tag = 'output window, operand 0, single buffered']
    %7 = vsyncpa [#allocation5], 0
    %8 = vsyncpa [#allocation8], 0
    %9 = vsyncpa [#allocation6], 0
    // Predicated region
    $region2: #{tpu_custom_call.1} parent=1 // pred_check
      _
    $region3: #{tpu_custom_call.1} parent=1 // pred_check_branch
      %11 = sbr.rel (0) target = $region5
    $region4: #{tpu_custom_call.1} parent=1 // pred_region
      %s13 = ssub.s32 16, 16
      %14 = vsyncadd [#allocation5], %s13
      %s16 = sshll.u32 [#allocation4], 4
      %s17 = int_to_ptr.vmem [resolvable:$true] %s16
      %19 = dma.hbm_to_vmem [thread:$0]  %s0, 16, %s17, [#allocation5]
    $region5: #{tpu_custom_call.1} parent=1 // pred_fallthru
      _
    // Predicated region
    $region6: #{tpu_custom_call.1} parent=1 // pred_check
      _
    $region7: #{tpu_custom_call.1} parent=1 // pred_check_branch
      %21 = sbr.rel (0) target = $region9
    $region8: #{tpu_custom_call.1} parent=1 // pred_region
      %s22 = sadd.s32 0, 0
      %s23 = smul.u32 2, %s22
      %s25 = ssub.s32 256, 256
      %26 = vsyncadd [#allocation8], %s25
      %s27 = smul.addr %s23, 128
      %s28 = scalar_lea.hbm %s1, %s27
      %s29 = sshll.u32 [#allocation7], 4
      %s30 = int_to_ptr.vmem [resolvable:$true] %s29
      %35 = dma.hbm_to_vmem [thread:$0]  %s28, 256, %s30, [#allocation8], 128, 128, 8
    $region9: #{tpu_custom_call.1} parent=1 // pred_fallthru
      _
    // Predicated region
    $region10: #{tpu_custom_call.1} parent=1 // pred_check
      _
    $region11: #{tpu_custom_call.1} parent=1 // pred_check_branch
      %37 = sbr.rel (0) target = $region13
    $region12: #{tpu_custom_call.1} parent=1 // pred_region
      %38 = dma.done [#allocation5], 16
    $region13: #{tpu_custom_call.1} parent=1 // pred_fallthru
      _
    // Predicated region
    $region14: #{tpu_custom_call.1} parent=1 // pred_check
      _
    $region15: #{tpu_custom_call.1} parent=1 // pred_check_branch
      %40 = sbr.rel (0) target = $region17
    $region16: #{tpu_custom_call.1} parent=1 // pred_region
      %41 = dma.done [#allocation8], 256
    $region17: #{tpu_custom_call.1} parent=1 // pred_fallthru
      _
    %s42 = sadd.s32 0, 0
    %s43 = smul.u32 2, %s42
    %p44 = scmp.eq.s32.totalorder 0, 0
    // Predicated region
    $region18: #{tpu_custom_call.1} parent=1 // pred_check
      %p45 = pneg %p44
    $region19: #{tpu_custom_call.1} parent=1 // pred_check_branch
      %47 = sbr.rel (%p45) target = $region21
    $region20: #{tpu_custom_call.1} parent=1 // pred_region
      %48 = vst [vmem:[#allocation2] sm:$0x1] 0.0
      %49 = vst [vmem:[#allocation3] sm:$0x1] 0.0
    $region21: #{tpu_custom_call.1} parent=1 // pred_fallthru
      _
    %v50 = vld [vmem:[#allocation4] sm:$0x1]
    %v51 = vld [vmem:[#allocation7] sm:$0xff]
    %v52 = vld [vmem:[#allocation7 + $0x8] sm:$0xff]
    %v54 = vlaneseq
    %v55 = vshrl.u32 %v54, 7
    %v56 = vsub.s32 0, %v55
    %v57 = vrot.slane %v50, %v56
    %v59 = vsub.f32 %v51, %v57
    %v60 = vsub.f32 %v52, %v57
    %v61 = vld [vmem:[#allocation2] sm:$0x1]
    %v62 = vmul.f32 %v59, %v59
    %v63 = vmul.f32 %v60, %v60
    %v64 = vadd.f32 %v62, %v63
    %v65 = vrot.slane %v64, 4
    %v66 = vadd.f32 %v64, %v65
    %v67 = vrot.slane %v66, 2
    %v68 = vadd.f32 %v66, %v67
    %v69 = vrot.slane %v68, 1
    %v70 = vadd.f32 %v68, %v69
    %v71 = vadd.f32 %v61, %v70
    %72 = vst [vmem:[#allocation2] sm:$0x1] %v71
    %v73 = vld [vmem:[#allocation3] sm:$0x1]
    %v74 = vadd.f32 %v59, %v60
    %v75 = vrot.slane %v74, 4
    %v76 = vadd.f32 %v74, %v75
    %v77 = vrot.slane %v76, 2
    %v78 = vadd.f32 %v76, %v77
    %v79 = vrot.slane %v78, 1
    %v80 = vadd.f32 %v78, %v79
    %v81 = vadd.f32 %v73, %v80
    %82 = vst [vmem:[#allocation3] sm:$0x1] %v81
    // Predicated region
    $region22: #{tpu_custom_call.1} parent=1 // pred_check
      %p83 = pneg %p44
    $region23: #{tpu_custom_call.1} parent=1 // pred_check_branch
      %85 = sbr.rel (%p83) target = $region25
    $region24: #{tpu_custom_call.1} parent=1 // pred_region
      %v86 = vld [vmem:[#allocation2] sm:$0x1]
      %v87 = vld [vmem:[#allocation3] sm:$0x1]
      %v89 = vlaneseq
      %v90 = vshrl.u32 %v89, 7
      %v91 = vsub.s32 0, %v90
      %v92 = vrot.slane %v87, %v91
      %vm94 = vcmask 1040384
      %v95 = vsel %vm94, %v86, %v92
      %96 = vst [vmem:[#allocation9] sm:$0x3] %v95
    $region25: #{tpu_custom_call.1} parent=1 // pred_fallthru
      _
    // Predicated region
    $region26: #{tpu_custom_call.1} parent=1 // pred_check
      _
    $region27: #{tpu_custom_call.1} parent=1 // pred_check_branch
      %98 = sbr.rel (0) target = $region29
    $region28: #{tpu_custom_call.1} parent=1 // pred_region
      %s100 = ssub.s32 32, 32
      %101 = vsyncadd [#allocation6], %s100
      %s103 = sshll.u32 [#allocation9], 4
      %s104 = int_to_ptr.vmem [resolvable:$true] %s103
      %106 = dma.vmem_to_hbm [thread:$0]  %s104, 32, %s2, [#allocation6]
    $region29: #{tpu_custom_call.1} parent=1 // pred_fallthru
      _
    // Predicated region
    $region30: #{tpu_custom_call.1} parent=1 // pred_check
      _
    $region31: #{tpu_custom_call.1} parent=1 // pred_check_branch
      %108 = sbr.rel (0) target = $region33
    $region32: #{tpu_custom_call.1} parent=1 // pred_region
      %109 = dma.done [#allocation6], 32
    $region33: #{tpu_custom_call.1} parent=1 // pred_fallthru
      _
    %110 = vsyncpa [#allocation5], 1
    %111 = vsyncpa [#allocation8], 1
    %112 = vsyncpa [#allocation6], 1

</llo_original>
